<compile_context>
chip_gen: v6e
topology: v6e:2x2x1
jax: 0.10.0
libtpu: 0.0.40
codegen_flags: <defaults>
</compile_context>

<pallas_src>
import jax
import jax.numpy as jnp
from jax.experimental import pallas as pl
from jax.experimental.pallas import tpu as pltpu


def _make_grounded_coref_kernel(span_on_lanes: bool):
    """Per-block kernel; the larger of Ns/Ni sits on the lane (last) axis."""

    def kernel(span_ref, img_ref, smask_ref, imask_ref, sse1_ref, sse2_ref):
        span = span_ref[...]      # (bb, Ns, D)  f32
        img = img_ref[...]        # (bb, Ni, D)  f32
        smask = smask_ref[...]    # orientation chosen in wrapper
        imask = imask_ref[...]

        if span_on_lanes:
            # aw[b, i, s] = span[b,s] . img[b,i]; Ns (larger) on lanes.
            mask = imask * smask                               # (bb,Ni,1)*(bb,1,Ns)
            sim = jnp.einsum('bid,bsd->bis', img, span,
                             preferred_element_type=jnp.float32)
            aw = sim * mask
            aw = jnp.where(aw != 0, aw, jnp.float32(-1e10))

            # direction 1: softmax over image axis (axis=1 here), re-masked.
            m1 = jnp.max(aw, axis=1, keepdims=True)
            e1 = jnp.exp(aw - m1)
            inv1 = 1.0 / jnp.sum(e1, axis=1, keepdims=True)    # small (bb,1,Ns)
            aw_first = (e1 * inv1) * mask
            att_first = jnp.einsum('bis,bid->bsd', aw_first, img,
                                   preferred_element_type=jnp.float32)

            # direction 2: softmax over span axis (lane axis here), re-masked.
            m2 = jnp.max(aw, axis=2, keepdims=True)
            e2 = jnp.exp(aw - m2)
            inv2 = 1.0 / jnp.sum(e2, axis=2, keepdims=True)    # small (bb,Ni,1)
            aw_second = (e2 * inv2) * mask
            att_second = jnp.einsum('bis,bsd->bid', aw_second, span,
                                    preferred_element_type=jnp.float32)
        else:
            # aw[b, s, i]; Ni (larger) on lanes.
            mask = smask * imask                               # (bb,Ns,1)*(bb,1,Ni)
            sim = jnp.einsum('bsd,bid->bsi', span, img,
                             preferred_element_type=jnp.float32)
            aw = sim * mask
            aw = jnp.where(aw != 0, aw, jnp.float32(-1e10))

            m1 = jnp.max(aw, axis=2, keepdims=True)
            e1 = jnp.exp(aw - m1)
            inv1 = 1.0 / jnp.sum(e1, axis=2, keepdims=True)
            aw_first = (e1 * inv1) * mask
            att_first = jnp.einsum('bsi,bid->bsd', aw_first, img,
                                   preferred_element_type=jnp.float32)

            m2 = jnp.max(aw, axis=1, keepdims=True)
            e2 = jnp.exp(aw - m2)
            inv2 = 1.0 / jnp.sum(e2, axis=1, keepdims=True)
            aw_second = (e2 * inv2) * mask
            att_second = jnp.einsum('bsi,bsd->bid', aw_second, span,
                                    preferred_element_type=jnp.float32)

        d1 = span - att_first                                  # (bb, Ns, D)
        sse1_ref[...] = jnp.sum(jnp.sum(d1 * d1, axis=2, keepdims=True),
                                axis=1, keepdims=True)         # (bb, 1, 1)
        d2 = img - att_second                                  # (bb, Ni, D)
        sse2_ref[...] = jnp.sum(jnp.sum(d2 * d2, axis=2, keepdims=True),
                                axis=1, keepdims=True)         # (bb, 1, 1)

    return kernel


def _round_up(x, m):
    return -(-x // m) * m


def _f32_tile_bytes(rows, lanes):
    """VMEM bytes of one f32 tile: trailing dims padded to (8, 128)."""
    return 4 * _round_up(max(rows, 1), 8) * _round_up(max(lanes, 1), 128)


def _per_batch_vmem_bytes(Ns, Ni, D, span_on_lanes):
    """Layout-aware f32 VMEM bytes per batch element in one grid step."""
    R, C = (Ni, Ns) if span_on_lanes else (Ns, Ni)
    emb_in = _f32_tile_bytes(Ns, D) + _f32_tile_bytes(Ni, D)
    mask_in = _f32_tile_bytes(R, 1) + _f32_tile_bytes(1, C)
    inputs = 2 * (emb_in + mask_in)                 # double-buffered input tiles
    outputs = 2 * 2 * _f32_tile_bytes(1, 1)         # two (.,1,1) outputs, dbl-buf
    temps = (6 * _f32_tile_bytes(R, C)              # mask/aw/exp/prob live temps
             + _f32_tile_bytes(Ns, D) + _f32_tile_bytes(Ni, D))  # att_first/second
    return inputs + outputs + temps


def _vmem_config():
    """(vmem_limit_bytes, bb-selection budget) derived from the TPU generation."""
    phys = None
    try:
        phys = getattr(pltpu.get_tpu_info(), "vmem_capacity_bytes", None)
    except Exception:
        phys = None
    if not phys:
        phys = 64 << 20                          # conservative fallback (v7x floor)
    limit = min(phys * 3 // 4, 100 << 20)        # 48 MiB on v7x, 96 MiB on v5e/v6e
    budget = limit * 17 // 20                    # ~15% headroom for compiler scratch
    return int(limit), int(budget)


def grounded_coreferencer_forward(span_emb, image_emb, span_mask, image_mask,
                                  max_block_b=64):
    """Returns the scalar loss of GroundedCoreferencer.forward."""
    B, Ns, D = span_emb.shape
    _, Ni, Di = image_emb.shape
    assert Di == D, "span and image embed dims must match for the dot product"

    span_on_lanes = Ns >= Ni     # put the larger axis on lanes

    span_emb = span_emb.astype(jnp.float32)
    image_emb = image_emb.astype(jnp.float32)
    if span_on_lanes:
        smask = span_mask.astype(jnp.float32).reshape(B, 1, Ns)
        imask = image_mask.astype(jnp.float32).reshape(B, Ni, 1)
        smask_bs, imask_bs = (1, Ns), (Ni, 1)
    else:
        smask = span_mask.astype(jnp.float32).reshape(B, Ns, 1)
        imask = image_mask.astype(jnp.float32).reshape(B, 1, Ni)
        smask_bs, imask_bs = (Ns, 1), (1, Ni)

    # Batch block size from the padding-aware VMEM estimate and the
    # per-generation budget; keep >= 2 grid blocks so both v7x TCs get work.
    vmem_limit, vmem_budget = _vmem_config()
    per_b = _per_batch_vmem_bytes(Ns, Ni, D, span_on_lanes)
    bb = int(max(1, min(B, max_block_b, vmem_budget // max(per_b, 1))))
    if B >= 2:
        bb = min(bb, (B + 1) // 2)
    n_blocks = -(-B // bb)
    if n_blocks > 1 and n_blocks % 2 == 1:
        n_blocks += 1            # even block count balances the 2-TC split
    B_pad = n_blocks * bb

    if B_pad != B:
        # Zero-padded batch rows are fully masked and contribute exactly 0 SSE.
        pad = ((0, B_pad - B), (0, 0), (0, 0))
        span_emb = jnp.pad(span_emb, pad)
        image_emb = jnp.pad(image_emb, pad)
        smask = jnp.pad(smask, pad)
        imask = jnp.pad(imask, pad)

    kernel = _make_grounded_coref_kernel(span_on_lanes)

    out_shape = (jax.ShapeDtypeStruct((B_pad, 1, 1), jnp.float32),
                 jax.ShapeDtypeStruct((B_pad, 1, 1), jnp.float32))

    sse1, sse2 = pl.pallas_call(
        kernel,
        out_shape=out_shape,
        grid_spec=pltpu.PrefetchScalarGridSpec(
            num_scalar_prefetch=0,
            grid=(n_blocks,),
            in_specs=[
                pl.BlockSpec((bb, Ns, D), lambda b: (b, 0, 0)),
                pl.BlockSpec((bb, Ni, D), lambda b: (b, 0, 0)),
                pl.BlockSpec((bb,) + smask_bs, lambda b: (b, 0, 0)),
                pl.BlockSpec((bb,) + imask_bs, lambda b: (b, 0, 0)),
            ],
            out_specs=[
                pl.BlockSpec((bb, 1, 1), lambda b: (b, 0, 0)),
                pl.BlockSpec((bb, 1, 1), lambda b: (b, 0, 0)),
            ],
        ),
        compiler_params=pltpu.CompilerParams(
            dimension_semantics=("parallel",),   # shards blocks across v7x's 2 TCs
            vmem_limit_bytes=vmem_limit,
        ),
    )(span_emb, image_emb, smask, imask)

    # torch F.mse_loss 'mean' reduction over ALL elements of the un-padded tensors.
    loss_first = jnp.sum(sse1) / (B * Ns * D)
    loss_second = jnp.sum(sse2) / (B * Ni * D)
    return loss_first + loss_second


def _reference_forward(span_emb, image_emb, span_mask, image_mask):
    """Pure-JAX reference mirroring the PyTorch forward, for verification."""
    span_emb = span_emb.astype(jnp.float32)
    image_emb = image_emb.astype(jnp.float32)
    mask = image_mask[:, None, :] * span_mask[:, :, None]
    aw = jnp.einsum('bsd,bid->bsi', span_emb, image_emb) * mask
    aw = jnp.where(aw != 0, aw, -1e10)
    aw1 = jax.nn.softmax(aw, axis=-1) * mask
    att_first = jnp.einsum('bsi,bid->bsd', aw1, image_emb)
    score = jnp.mean((span_emb - att_first) ** 2)
    awt = jnp.swapaxes(aw, 1, 2)
    aw2 = jax.nn.softmax(awt, axis=-1) * jnp.swapaxes(mask, 1, 2)
    att_second = jnp.einsum('bis,bsd->bid', aw2, span_emb)
    score = score + jnp.mean((image_emb - att_second) ** 2)
    return score


if __name__ == "__main__":
    key = jax.random.PRNGKey(0)
    k1, k2 = jax.random.split(key)

    B, Ns, Ni, D = 2, 16, 8, 32
    span_emb = jax.random.normal(k1, (B, Ns, D), dtype=jnp.float32)
    image_emb = jax.random.normal(k2, (B, Ni, D), dtype=jnp.float32)

    # Masks with some padding (zeros) to exercise the masking path.
    span_mask = jnp.stack([
        jnp.concatenate([jnp.ones(12), jnp.zeros(4)]),
        jnp.ones(16),
    ]).astype(jnp.float32)
    image_mask = jnp.stack([
        jnp.ones(8),
        jnp.concatenate([jnp.ones(5), jnp.zeros(3)]),
    ]).astype(jnp.float32)

    fwd = jax.jit(grounded_coreferencer_forward)
    loss = fwd(span_emb, image_emb, span_mask, image_mask)
    loss = jax.block_until_ready(loss)

    ref = _reference_forward(span_emb, image_emb, span_mask, image_mask)
    ref = jax.block_until_ready(ref)

    assert jnp.allclose(loss, ref, rtol=1e-4, atol=1e-5), (loss, ref)
    print("KERNEL_OK")
</pallas_src>

<mosaic_0001>
module attributes {stable_mosaic.version = 11 : i64} {
  func.func @kernel(%arg0: i32, %arg1: memref<1x16x32xf32, #tpu.memory_space<vmem>>, %arg2: memref<1x8x32xf32, #tpu.memory_space<vmem>>, %arg3: memref<1x1x16xf32, #tpu.memory_space<vmem>>, %arg4: memref<1x8x1xf32, #tpu.memory_space<vmem>>, %arg5: memref<1x1x1xf32, #tpu.memory_space<vmem>>, %arg6: memref<1x1x1xf32, #tpu.memory_space<vmem>>) attributes {dimension_semantics = [#tpu.dimension_semantics<parallel>], iteration_bounds = array<i64: 2>, scalar_prefetch = 0 : i64, scratch_operands = 0 : i64, tpu.core_type = #tpu.core_type<tc>, window_params = [{transform_indices = @transform_0, window_bounds = array<i64: 1, 16, 32>}, {transform_indices = @transform_1, window_bounds = array<i64: 1, 8, 32>}, {transform_indices = @transform_2, window_bounds = array<i64: 1, 1, 16>}, {transform_indices = @transform_3, window_bounds = array<i64: 1, 8, 1>}, {transform_indices = @transform_4, window_bounds = array<i64: 1, 1, 1>}, {transform_indices = @transform_5, window_bounds = array<i64: 1, 1, 1>}]} {
    %c0 = arith.constant 0 : index
    %c0_0 = arith.constant 0 : index
    %c0_1 = arith.constant 0 : index
    %0 = vector.load %arg1[%c0, %c0_0, %c0_1] : memref<1x16x32xf32, #tpu.memory_space<vmem>>, vector<1x16x32xf32>
    %c0_2 = arith.constant 0 : index
    %c0_3 = arith.constant 0 : index
    %c0_4 = arith.constant 0 : index
    %1 = vector.load %arg2[%c0_2, %c0_3, %c0_4] : memref<1x8x32xf32, #tpu.memory_space<vmem>>, vector<1x8x32xf32>
    %c0_5 = arith.constant 0 : index
    %c0_6 = arith.constant 0 : index
    %c0_7 = arith.constant 0 : index
    %2 = vector.load %arg3[%c0_5, %c0_6, %c0_7] : memref<1x1x16xf32, #tpu.memory_space<vmem>>, vector<1x1x16xf32>
    %c0_8 = arith.constant 0 : index
    %c0_9 = arith.constant 0 : index
    %c0_10 = arith.constant 0 : index
    %3 = vector.load %arg4[%c0_8, %c0_9, %c0_10] : memref<1x8x1xf32, #tpu.memory_space<vmem>>, vector<1x8x1xf32>
    %4 = vector.broadcast %3 : vector<1x8x1xf32> to vector<1x8x16xf32>
    %5 = vector.broadcast %2 : vector<1x1x16xf32> to vector<1x8x16xf32>
    %6 = arith.mulf %4, %5 : vector<1x8x16xf32>
    "tpu.trace_start"() <{level = 10 : i32, message = "bid,bsd->bis"}> : () -> ()
    %cst = arith.constant dense<0.000000e+00> : vector<1x8x16xf32>
    %7 = tpu.matmul %1, %0, %cst {dimension_numbers = #tpu.dot_dimension_numbers<[2], [2], [1], [1], [0, 0, 0, 1, 1, 1], [0], [0]>} : vector<1x8x32xf32>, vector<1x16x32xf32>, vector<1x8x16xf32> -> vector<1x8x16xf32>
    "tpu.trace_stop"() : () -> ()
    %8 = arith.mulf %7, %6 : vector<1x8x16xf32>
    %cst_11 = arith.constant 0.000000e+00 : f32
    %9 = vector.broadcast %cst_11 : f32 to vector<1x8x16xf32>
    %10 = arith.cmpf one, %8, %9 : vector<1x8x16xf32>
    %cst_12 = arith.constant -1.000000e+10 : f32
    %11 = vector.broadcast %cst_12 : f32 to vector<1x8x16xf32>
    %12 = arith.select %10, %8, %11 : vector<1x8x16xi1>, vector<1x8x16xf32>
    %cst_13 = arith.constant dense<0xFF800000> : vector<1x16xf32>
    %13 = vector.multi_reduction <maximumf>, %12, %cst_13 [1] : vector<1x8x16xf32> to vector<1x16xf32>
    %14 = vector.shape_cast %13 : vector<1x16xf32> to vector<1x1x16xf32>
    %15 = vector.broadcast %14 : vector<1x1x16xf32> to vector<1x8x16xf32>
    %16 = arith.subf %12, %15 : vector<1x8x16xf32>
    %17 = math.exp %16 : vector<1x8x16xf32>
    %cst_14 = arith.constant dense<0.000000e+00> : vector<1x16xf32>
    %18 = vector.multi_reduction <add>, %17, %cst_14 [1] : vector<1x8x16xf32> to vector<1x16xf32>
    %19 = vector.shape_cast %18 : vector<1x16xf32> to vector<1x1x16xf32>
    %cst_15 = arith.constant 1.000000e+00 : f32
    %20 = vector.broadcast %cst_15 : f32 to vector<1x1x16xf32>
    %21 = arith.divf %20, %19 : vector<1x1x16xf32>
    %22 = vector.broadcast %21 : vector<1x1x16xf32> to vector<1x8x16xf32>
    %23 = arith.mulf %17, %22 : vector<1x8x16xf32>
    %24 = arith.mulf %23, %6 : vector<1x8x16xf32>
    "tpu.trace_start"() <{level = 10 : i32, message = "bis,bid->bsd"}> : () -> ()
    %cst_16 = arith.constant dense<0.000000e+00> : vector<1x16x32xf32>
    %25 = tpu.matmul %24, %1, %cst_16 {dimension_numbers = #tpu.dot_dimension_numbers<[1], [1], [2], [2], [0, 0, 0, 2, 1, 2], [0], [0]>} : vector<1x8x16xf32>, vector<1x8x32xf32>, vector<1x16x32xf32> -> vector<1x16x32xf32>
    "tpu.trace_stop"() : () -> ()
    %cst_17 = arith.constant dense<0xFF800000> : vector<1x8xf32>
    %26 = vector.multi_reduction <maximumf>, %12, %cst_17 [2] : vector<1x8x16xf32> to vector<1x8xf32>
    %27 = vector.shape_cast %26 : vector<1x8xf32> to vector<1x8x1xf32>
    %28 = vector.broadcast %27 : vector<1x8x1xf32> to vector<1x8x16xf32>
    %29 = arith.subf %12, %28 : vector<1x8x16xf32>
    %30 = math.exp %29 : vector<1x8x16xf32>
    %cst_18 = arith.constant dense<0.000000e+00> : vector<1x8xf32>
    %31 = vector.multi_reduction <add>, %30, %cst_18 [2] : vector<1x8x16xf32> to vector<1x8xf32>
    %32 = vector.shape_cast %31 : vector<1x8xf32> to vector<1x8x1xf32>
    %cst_19 = arith.constant 1.000000e+00 : f32
    %33 = vector.broadcast %cst_19 : f32 to vector<1x8x1xf32>
    %34 = arith.divf %33, %32 : vector<1x8x1xf32>
    %35 = vector.broadcast %34 : vector<1x8x1xf32> to vector<1x8x16xf32>
    %36 = arith.mulf %30, %35 : vector<1x8x16xf32>
    %37 = arith.mulf %36, %6 : vector<1x8x16xf32>
    "tpu.trace_start"() <{level = 10 : i32, message = "bis,bsd->bid"}> : () -> ()
    %cst_20 = arith.constant dense<0.000000e+00> : vector<1x8x32xf32>
    %38 = tpu.matmul %37, %0, %cst_20 {dimension_numbers = #tpu.dot_dimension_numbers<[2], [1], [1], [2], [0, 0, 0, 1, 1, 2], [0], [0]>} : vector<1x8x16xf32>, vector<1x16x32xf32>, vector<1x8x32xf32> -> vector<1x8x32xf32>
    "tpu.trace_stop"() : () -> ()
    %39 = arith.subf %0, %25 : vector<1x16x32xf32>
    %40 = arith.mulf %39, %39 : vector<1x16x32xf32>
    %cst_21 = arith.constant dense<0.000000e+00> : vector<1x16xf32>
    %41 = vector.multi_reduction <add>, %40, %cst_21 [2] : vector<1x16x32xf32> to vector<1x16xf32>
    %42 = vector.shape_cast %41 : vector<1x16xf32> to vector<1x16x1xf32>
    %cst_22 = arith.constant dense<0.000000e+00> : vector<1x1xf32>
    %43 = vector.multi_reduction <add>, %42, %cst_22 [1] : vector<1x16x1xf32> to vector<1x1xf32>
    %44 = vector.shape_cast %43 : vector<1x1xf32> to vector<1x1x1xf32>
    %c0_23 = arith.constant 0 : index
    %c0_24 = arith.constant 0 : index
    %c0_25 = arith.constant 0 : index
    %45 = vector.load %arg5[%c0_23, %c0_24, %c0_25] : memref<1x1x1xf32, #tpu.memory_space<vmem>>, vector<1x1x1xf32>
    tpu.vector_store %arg5[%c0_23, %c0_24, %c0_25], %44 {strides = array<i32>} : memref<1x1x1xf32, #tpu.memory_space<vmem>>, vector<1x1x1xf32>,
    %46 = arith.subf %1, %38 : vector<1x8x32xf32>
    %47 = arith.mulf %46, %46 : vector<1x8x32xf32>
    %cst_26 = arith.constant dense<0.000000e+00> : vector<1x8xf32>
    %48 = vector.multi_reduction <add>, %47, %cst_26 [2] : vector<1x8x32xf32> to vector<1x8xf32>
    %49 = vector.shape_cast %48 : vector<1x8xf32> to vector<1x8x1xf32>
    %cst_27 = arith.constant dense<0.000000e+00> : vector<1x1xf32>
    %50 = vector.multi_reduction <add>, %49, %cst_27 [1] : vector<1x8x1xf32> to vector<1x1xf32>
    %51 = vector.shape_cast %50 : vector<1x1xf32> to vector<1x1x1xf32>
    %c0_28 = arith.constant 0 : index
    %c0_29 = arith.constant 0 : index
    %c0_30 = arith.constant 0 : index
    %52 = vector.load %arg6[%c0_28, %c0_29, %c0_30] : memref<1x1x1xf32, #tpu.memory_space<vmem>>, vector<1x1x1xf32>
    tpu.vector_store %arg6[%c0_28, %c0_29, %c0_30], %51 {strides = array<i32>} : memref<1x1x1xf32, #tpu.memory_space<vmem>>, vector<1x1x1xf32>,
    return
  }
  func.func @transform_0(%arg0: i32) -> (i32, i32, i32) {
    %c0_i32 = arith.constant 0 : i32
    %c0_i32_0 = arith.constant 0 : i32
    %c0_i32_1 = arith.constant 0 : i32
    return %arg0, %c0_i32, %c0_i32_0 : i32, i32, i32
  }
  func.func @transform_1(%arg0: i32) -> (i32, i32, i32) {
    %c0_i32 = arith.constant 0 : i32
    %c0_i32_0 = arith.constant 0 : i32
    %c0_i32_1 = arith.constant 0 : i32
    return %arg0, %c0_i32, %c0_i32_0 : i32, i32, i32
  }
  func.func @transform_2(%arg0: i32) -> (i32, i32, i32) {
    %c0_i32 = arith.constant 0 : i32
    %c0_i32_0 = arith.constant 0 : i32
    %c0_i32_1 = arith.constant 0 : i32
    return %arg0, %c0_i32, %c0_i32_0 : i32, i32, i32
  }
  func.func @transform_3(%arg0: i32) -> (i32, i32, i32) {
    %c0_i32 = arith.constant 0 : i32
    %c0_i32_0 = arith.constant 0 : i32
    %c0_i32_1 = arith.constant 0 : i32
    return %arg0, %c0_i32, %c0_i32_0 : i32, i32, i32
  }
  func.func @transform_4(%arg0: i32) -> (i32, i32, i32) {
    %c0_i32 = arith.constant 0 : i32
    %c0_i32_0 = arith.constant 0 : i32
    %c0_i32_1 = arith.constant 0 : i32
    return %arg0, %c0_i32, %c0_i32_0 : i32, i32, i32
  }
  func.func @transform_5(%arg0: i32) -> (i32, i32, i32) {
    %c0_i32 = arith.constant 0 : i32
    %c0_i32_0 = arith.constant 0 : i32
    %c0_i32_1 = arith.constant 0 : i32
    return %arg0, %c0_i32, %c0_i32_0 : i32, i32, i32
  }
}

</mosaic_0001>

<llo_original>
// kernel: grounded_coreferencer_forward.1
$region0: #{grounded_coreferencer_forward.1}
  #allocation0 [shape = 'u32[]', space=smem, size = 0x4, offset = 0x4, fixed_abs, tag = 'smem constant byte address 0x4 - core index']
  #allocation1 [shape = 'u32[144,128]{1,0:T(1,128)}', space=vmem, size = 0x12000, scoped, tag = 'internal scratch']
  %s0 = inlined_call_operand.hbm [shape: f32[2,16,32], index: 0, kind: input, shape index: {}]
  %s1 = inlined_call_operand.vmem [shape: f32[2,8,32], index: 1, kind: input, shape index: {}]
  %s2 = inlined_call_operand.vmem [shape: f32[2,1,16], index: 2, kind: input, shape index: {}]
  %s3 = inlined_call_operand.vmem [shape: f32[2,8,1], index: 3, kind: input, shape index: {}]
  %s4 = inlined_call_operand.vmem [shape: f32[2,1,1], index: 4, kind: output, shape index: {0}]
  %s5 = inlined_call_operand.vmem [shape: f32[2,1,1], index: 5, kind: output, shape index: {1}]
  %6 = xla_tuple %s4, %s5
  %s7 = sld [smem:[#allocation0]]
  $region61: #{grounded_coreferencer_forward.1} parent=0
    _
  %s9 = ssub.s32 1, %s7
  %s10 = scalar_select 0, %s9, %s7
  $region1: #{grounded_coreferencer_forward.1} parent=0
    #allocation2 [shape = 'u8[16384]{0}', space=vmem, size = 0x4000, scoped, tag = 'input window, operand 0']
    #allocation3 [shape = 's32[2]{0}', space=sflag, size = 0x8, scoped, tag = 'scoped memory for grounded_coreferencer_forward.1']
    %11 = vsyncpa [#allocation3], 0
    %s12 = scalar_lea.sflag [#allocation3], 1
    %13 = vsyncpa %s12, 0
    loop: start=0, step=1, limit=4
    $region2: #{grounded_coreferencer_forward.1} parent=1 // loop_pre_header
      _
    $region3: #{grounded_coreferencer_forward.1} parent=1 // loop_header
      %s15 = sphi 0, %s19
      %p16 = scmp.ge.s32.totalorder %s15, 4
      %s25 = sphi 0, %s27
      %s28 = sphi 0, %s25
      %s29 = sphi 0, %s28
      %s45 = sphi 0, %s29
      %s51 = sphi 0, %s53
      %s54 = sphi 0, %s51
      %s55 = sphi 0, %s54
      %s71 = sphi 0, %s55
      %s77 = sphi 0, %s79
      %s80 = sphi 0, %s77
      %s81 = sphi 0, %s80
      %s97 = sphi 0, %s81
      %s103 = sphi 0, %s105
      %s106 = sphi 0, %s103
      %s107 = sphi 0, %s106
      %s123 = sphi 0, %s107
      %s129 = sphi 0, %s131
      %s132 = sphi 0, %s129
      %s133 = sphi 0, %s132
      %s149 = sphi 0, %s133
      %s155 = sphi 0, %s157
      %s158 = sphi 0, %s155
      %s159 = sphi 0, %s158
      %s175 = sphi 0, %s159
    $region4: #{grounded_coreferencer_forward.1} parent=1 // loop_header_branch
      %18 = sbr.rel (%p16) target = $region8
    $region5: #{grounded_coreferencer_forward.1} parent=1 // loop_body
      %s20 = ssub.s32 %s15, 1
      %s21 = ssub.s32 %s15, 2
      %s22 = sadd.s32 %s15, 1
      %s23 = ssub.s32 %s15, %s22
      %p24 = scmp.eq.s32.totalorder %s23, 0
      %s26 = sadd.s32 %s25, 1
      %s27 = scalar_select %p24, %s25, %s26
      %p30 = pneg %p24
      %p31 = scmp.eq.s32.totalorder %s15, 1
      %p32 = por %p30, %p31
      %p33 = scmp.ne.s32.totalorder %s25, %s28
      %p34 = scmp.eq.s32.totalorder %s15, 0
      %p35 = por %p33, %p34
      %p36 = scmp.ne.s32.totalorder %s25, %s28
      %p37 = scmp.eq.s32.totalorder %s20, 1
      %p38 = por %p36, %p37
      %p39 = scmp.ne.s32.totalorder %s28, %s29
      %p40 = scmp.eq.s32.totalorder %s20, 0
      %p41 = por %p39, %p40
      %p42 = scmp.ne.s32.totalorder %s28, %s29
      %p43 = scmp.eq.s32.totalorder %s21, 1
      %p44 = por %p42, %p43
      %p46 = scmp.ne.s32.totalorder %s29, %s45
      %p47 = scmp.eq.s32.totalorder %s21, 0
      %p48 = por %p46, %p47
      %s49 = ssub.s32 %s15, %s22
      %p50 = scmp.eq.s32.totalorder %s49, 0
      %s52 = sadd.s32 %s51, 1
      %s53 = scalar_select %p50, %s51, %s52
      %p56 = pneg %p50
      %p57 = scmp.eq.s32.totalorder %s15, 1
      %p58 = por %p56, %p57
      %p59 = scmp.ne.s32.totalorder %s51, %s54
      %p60 = scmp.eq.s32.totalorder %s15, 0
      %p61 = por %p59, %p60
      %p62 = scmp.ne.s32.totalorder %s51, %s54
      %p63 = scmp.eq.s32.totalorder %s20, 1
      %p64 = por %p62, %p63
      %p65 = scmp.ne.s32.totalorder %s54, %s55
      %p66 = scmp.eq.s32.totalorder %s20, 0
      %p67 = por %p65, %p66
      %p68 = scmp.ne.s32.totalorder %s54, %s55
      %p69 = scmp.eq.s32.totalorder %s21, 1
      %p70 = por %p68, %p69
      %p72 = scmp.ne.s32.totalorder %s55, %s71
      %p73 = scmp.eq.s32.totalorder %s21, 0
      %p74 = por %p72, %p73
      %s75 = ssub.s32 %s15, %s22
      %p76 = scmp.eq.s32.totalorder %s75, 0
      %s78 = sadd.s32 %s77, 1
      %s79 = scalar_select %p76, %s77, %s78
      %p82 = pneg %p76
      %p83 = scmp.eq.s32.totalorder %s15, 1
      %p84 = por %p82, %p83
      %p85 = scmp.ne.s32.totalorder %s77, %s80
      %p86 = scmp.eq.s32.totalorder %s15, 0
      %p87 = por %p85, %p86
      %p88 = scmp.ne.s32.totalorder %s77, %s80
      %p89 = scmp.eq.s32.totalorder %s20, 1
      %p90 = por %p88, %p89
      %p91 = scmp.ne.s32.totalorder %s80, %s81
      %p92 = scmp.eq.s32.totalorder %s20, 0
      %p93 = por %p91, %p92
      %p94 = scmp.ne.s32.totalorder %s80, %s81
      %p95 = scmp.eq.s32.totalorder %s21, 1
      %p96 = por %p94, %p95
      %p98 = scmp.ne.s32.totalorder %s81, %s97
      %p99 = scmp.eq.s32.totalorder %s21, 0
      %p100 = por %p98, %p99
      %s101 = ssub.s32 %s15, %s22
      %p102 = scmp.eq.s32.totalorder %s101, 0
      %s104 = sadd.s32 %s103, 1
      %s105 = scalar_select %p102, %s103, %s104
      %p108 = pneg %p102
      %p109 = scmp.eq.s32.totalorder %s15, 1
      %p110 = por %p108, %p109
      %p111 = scmp.ne.s32.totalorder %s103, %s106
      %p112 = scmp.eq.s32.totalorder %s15, 0
      %p113 = por %p111, %p112
      %p114 = scmp.ne.s32.totalorder %s103, %s106
      %p115 = scmp.eq.s32.totalorder %s20, 1
      %p116 = por %p114, %p115
      %p117 = scmp.ne.s32.totalorder %s106, %s107
      %p118 = scmp.eq.s32.totalorder %s20, 0
      %p119 = por %p117, %p118
      %p120 = scmp.ne.s32.totalorder %s106, %s107
      %p121 = scmp.eq.s32.totalorder %s21, 1
      %p122 = por %p120, %p121
      %p124 = scmp.ne.s32.totalorder %s107, %s123
      %p125 = scmp.eq.s32.totalorder %s21, 0
      %p126 = por %p124, %p125
      %s127 = ssub.s32 %s15, %s22
      %p128 = scmp.eq.s32.totalorder %s127, 0
      %s130 = sadd.s32 %s129, 1
      %s131 = scalar_select %p128, %s129, %s130
      %p134 = pneg %p128
      %p135 = scmp.eq.s32.totalorder %s15, 1
      %p136 = por %p134, %p135
      %p137 = scmp.ne.s32.totalorder %s129, %s132
      %p138 = scmp.eq.s32.totalorder %s15, 0
      %p139 = por %p137, %p138
      %p140 = scmp.ne.s32.totalorder %s129, %s132
      %p141 = scmp.eq.s32.totalorder %s20, 1
      %p142 = por %p140, %p141
      %p143 = scmp.ne.s32.totalorder %s132, %s133
      %p144 = scmp.eq.s32.totalorder %s20, 0
      %p145 = por %p143, %p144
      %p146 = scmp.ne.s32.totalorder %s132, %s133
      %p147 = scmp.eq.s32.totalorder %s21, 1
      %p148 = por %p146, %p147
      %p150 = scmp.ne.s32.totalorder %s133, %s149
      %p151 = scmp.eq.s32.totalorder %s21, 0
      %p152 = por %p150, %p151
      %s153 = ssub.s32 %s15, %s22
      %p154 = scmp.eq.s32.totalorder %s153, 0
      %s156 = sadd.s32 %s155, 1
      %s157 = scalar_select %p154, %s155, %s156
      %p160 = pneg %p154
      %p161 = scmp.eq.s32.totalorder %s15, 1
      %p162 = por %p160, %p161
      %p163 = scmp.ne.s32.totalorder %s155, %s158
      %p164 = scmp.eq.s32.totalorder %s15, 0
      %p165 = por %p163, %p164
      %p166 = scmp.ne.s32.totalorder %s155, %s158
      %p167 = scmp.eq.s32.totalorder %s20, 1
      %p168 = por %p166, %p167
      %p169 = scmp.ne.s32.totalorder %s158, %s159
      %p170 = scmp.eq.s32.totalorder %s20, 0
      %p171 = por %p169, %p170
      %p172 = scmp.ne.s32.totalorder %s158, %s159
      %p173 = scmp.eq.s32.totalorder %s21, 1
      %p174 = por %p172, %p173
      %p176 = scmp.ne.s32.totalorder %s159, %s175
      %p177 = scmp.eq.s32.totalorder %s21, 0
      %p178 = por %p176, %p177
      %p179 = scmp.le.s32.totalorder 1, %s15
      %p180 = scmp.lt.s32.totalorder %s15, 3
      %p181 = pnand %p179, %p180
      %p182 = pneg %p181
      // Predicated region
      $region9: #{grounded_coreferencer_forward.1} parent=5 // pred_check
        _
      $region10: #{grounded_coreferencer_forward.1} parent=5 // pred_check_branch
        %184 = sbr.rel (%p181) target = $region12
      $region11: #{grounded_coreferencer_forward.1} parent=5 // pred_region
        %s185 = ssub.s32 %s15, 1
      $region12: #{grounded_coreferencer_forward.1} parent=5 // pred_fallthru
        _
      %p186 = scmp.lt.s32.totalorder %s15, 2
      // Predicated region
      $region13: #{grounded_coreferencer_forward.1} parent=5 // pred_check
        %p187 = pneg %p186
      $region14: #{grounded_coreferencer_forward.1} parent=5 // pred_check_branch
        %189 = sbr.rel (%p187) target = $region16
      $region15: #{grounded_coreferencer_forward.1} parent=5 // pred_region
        // Predicated region
        $region17: #{grounded_coreferencer_forward.1} parent=15 // pred_check
          %p190 = pneg %p35
        $region18: #{grounded_coreferencer_forward.1} parent=15 // pred_check_branch
          %192 = sbr.rel (%p190) target = $region20
        $region19: #{grounded_coreferencer_forward.1} parent=15 // pred_region
          %s193 = sand.u32 %s25, 1
          %s194 = scalar_lea.sflag [#allocation3], %s193
          %s195 = sand.u32 %s25, 1
          %s196 = smul.addr %s195, 16
          %s197 = scalar_lea.vmem [#allocation2], %s196
          %s199 = ssub.s32 256, 256
          %200 = vsyncadd %s194, %s199
          %s201 = smul.addr %s15, 2
          %s202 = smul.addr %s201, 128
          %s203 = scalar_lea.hbm %s0, %s202
          %s204 = sshll.u32 %s197, 4
          %s205 = int_to_ptr.vmem [resolvable:$true] %s204
          %210 = dma.hbm_to_vmem [thread:$0]  %s203, 256, %s205, %s194, 128, 128, 8
        $region20: #{grounded_coreferencer_forward.1} parent=15 // pred_fallthru
          _
        // Predicated region
        $region21: #{grounded_coreferencer_forward.1} parent=15 // pred_check
          %p211 = pneg %p61
        $region22: #{grounded_coreferencer_forward.1} parent=15 // pred_check_branch
          %213 = sbr.rel (%p211) target = $region24
        $region23: #{grounded_coreferencer_forward.1} parent=15 // pred_region
          %p214 = scmp.lt.s32.totalorder %s15, 1
          %s215 = scalar_select %p214, %s15, 1
          %s216 = smul.addr %s215, 8
          %s217 = scalar_lea.vmem %s1, %s216
        $region24: #{grounded_coreferencer_forward.1} parent=15 // pred_fallthru
          _
        // Predicated region
        $region25: #{grounded_coreferencer_forward.1} parent=15 // pred_check
          %p218 = pneg %p87
        $region26: #{grounded_coreferencer_forward.1} parent=15 // pred_check_branch
          %220 = sbr.rel (%p218) target = $region28
        $region27: #{grounded_coreferencer_forward.1} parent=15 // pred_region
          %p221 = scmp.lt.s32.totalorder %s15, 1
          %s222 = scalar_select %p221, %s15, 1
          %s223 = scalar_lea.vmem %s2, %s222
        $region28: #{grounded_coreferencer_forward.1} parent=15 // pred_fallthru
          _
        // Predicated region
        $region29: #{grounded_coreferencer_forward.1} parent=15 // pred_check
          %p224 = pneg %p113
        $region30: #{grounded_coreferencer_forward.1} parent=15 // pred_check_branch
          %226 = sbr.rel (%p224) target = $region32
        $region31: #{grounded_coreferencer_forward.1} parent=15 // pred_region
          %p227 = scmp.lt.s32.totalorder %s15, 1
          %s228 = scalar_select %p227, %s15, 1
          %s229 = smul.addr %s228, 8
          %s230 = scalar_lea.vmem %s3, %s229
        $region32: #{grounded_coreferencer_forward.1} parent=15 // pred_fallthru
          _
      $region16: #{grounded_coreferencer_forward.1} parent=5 // pred_fallthru
        _
      %p231 = scmp.le.s32.totalorder 1, %s15
      %p232 = scmp.lt.s32.totalorder %s15, 3
      %p233 = pnand %p231, %p232
      %p234 = pneg %p233
      // Predicated region
      $region33: #{grounded_coreferencer_forward.1} parent=5 // pred_check
        _
      $region34: #{grounded_coreferencer_forward.1} parent=5 // pred_check_branch
        %236 = sbr.rel (%p233) target = $region36
      $region35: #{grounded_coreferencer_forward.1} parent=5 // pred_region
        %s237 = ssub.s32 %s15, 1
        %s238 = sand.u32 %s28, 1
        %s239 = scalar_lea.sflag [#allocation3], %s238
        %s240 = sand.u32 %s28, 1
        %s241 = smul.addr %s240, 16
        %s242 = scalar_lea.vmem [#allocation2], %s241
        // Predicated region
        $region37: #{grounded_coreferencer_forward.1} parent=35 // pred_check
          %p243 = pneg %p41
        $region38: #{grounded_coreferencer_forward.1} parent=35 // pred_check_branch
          %245 = sbr.rel (%p243) target = $region40
        $region39: #{grounded_coreferencer_forward.1} parent=35 // pred_region
          %246 = dma.done %s239, 256
        $region40: #{grounded_coreferencer_forward.1} parent=35 // pred_fallthru
          _
        %s247 = sand.u32 %s28, 1
        %s248 = scalar_lea.sflag [#allocation3], %s247
        %s249 = sand.u32 %s28, 1
        %s250 = smul.addr %s249, 16
        %s251 = scalar_lea.vmem [#allocation2], %s250
        %p252 = pneg %p41
        %p253 = pneg %p38
        %p254 = scmp.lt.s32.totalorder %s20, 1
        %s255 = scalar_select %p254, %s20, 1
        %s256 = smul.addr %s255, 8
        %s257 = scalar_lea.vmem %s1, %s256
        %p258 = pneg %p67
        %p259 = pneg %p64
        %p260 = scmp.lt.s32.totalorder %s20, 1
        %s261 = scalar_select %p260, %s20, 1
        %s262 = scalar_lea.vmem %s2, %s261
        %p263 = pneg %p93
        %p264 = pneg %p90
        %p265 = scmp.lt.s32.totalorder %s20, 1
        %s266 = scalar_select %p265, %s20, 1
        %s267 = smul.addr %s266, 8
        %s268 = scalar_lea.vmem %s3, %s267
        %p269 = pneg %p119
        %p270 = pneg %p116
        %p271 = pneg %p145
        %p272 = pneg %p142
        %p273 = scmp.lt.s32.totalorder %s20, 1
        %s274 = scalar_select %p273, %s20, 1
        %s275 = scalar_lea.vmem %s4, %s274
        %p276 = pneg %p171
        %p277 = pneg %p168
        %p278 = scmp.lt.s32.totalorder %s20, 1
        %s279 = scalar_select %p278, %s20, 1
        %s280 = scalar_lea.vmem %s5, %s279
        %p281 = scmp.lt.s32.totalorder %s20, 1
        %s282 = scalar_select %p281, %s20, 1
        %s283 = smul.addr %s282, 8
        %s284 = scalar_lea.vmem %s1, %s283
        %p285 = scmp.lt.s32.totalorder %s20, 1
        %s286 = scalar_select %p285, %s20, 1
        %s287 = scalar_lea.vmem %s2, %s286
        %p288 = scmp.lt.s32.totalorder %s20, 1
        %s289 = scalar_select %p288, %s20, 1
        %s290 = smul.addr %s289, 8
        %s291 = scalar_lea.vmem %s3, %s290
        %p292 = scmp.lt.s32.totalorder %s20, 1
        %s293 = scalar_select %p292, %s20, 1
        %s294 = scalar_lea.vmem %s4, %s293
        %p295 = scmp.lt.s32.totalorder %s20, 1
        %s296 = scalar_select %p295, %s20, 1
        %s297 = scalar_lea.vmem %s5, %s296
        %v298 = vld [vmem:[%s242] sm:$0xff]
        %v299 = vld [vmem:[%s242 + $0x8] sm:$0xff]
        %v300 = vld [vmem:[%s284] sm:$0xff]
        %v301 = vld [vmem:[%s287] sm:$0x1]
        %v302 = vld [vmem:[%s291] sm:$0xff]
        %304 = vset.pattern.permute.xlu0 0
        %305 = vperm.xlu0 %304, %v302
        %v306 = vpop.permute.xlu0 %305
        %v309 = vlaneseq
        %v310 = vshrl.u32 %v309, 7
        %v311 = vsub.s32 0, %v310
        %v312 = vrot.slane %v301, %v311
        %v314 = vmul.f32 %v306, %v312
        %vm315 = vcmask 261120
        %v317 = vsel %vm315, %v300, 0
        %v320 = vsel %vm315, %v298, 0
        %v323 = vsel %vm315, %v299, 0
        %325 = vmatprep.subr.mxu0 0.0
        %326 = vmatpush1.xpose.msra.mxu0 0.0
        %327 = vmatprep.subr.mxu0 0.0
        %328 = vmatpush1.xpose.msra.mxu0 0.0
        %329 = vmatprep.subr.mxu0 0.0
        %330 = vmatpush1.xpose.msra.mxu0 0.0
        %331 = vmatprep.subr.mxu0 0.0
        %332 = vmatpush1.xpose.msra.mxu0 0.0
        %333 = vmatprep.subr.mxu0 0.0
        %334 = vmatpush1.xpose.msra.mxu0 0.0
        %335 = vmatprep.subr.mxu0 0.0
        %336 = vmatpush1.xpose.msra.mxu0 0.0
        %337 = vmatprep.subr.mxu0 0.0
        %338 = vmatpush1.xpose.msra.mxu0 0.0
        %339 = vmatprep.subr.mxu0 0.0
        %340 = vmatpush1.xpose.msra.mxu0 0.0
        %341 = vmatprep.subr.mxu0 0.0
        %342 = vmatpush1.xpose.msra.mxu0 0.0
        %343 = vmatprep.subr.mxu0 0.0
        %344 = vmatpush1.xpose.msra.mxu0 0.0
        %345 = vmatprep.subr.mxu0 0.0
        %346 = vmatpush1.xpose.msra.mxu0 0.0
        %347 = vmatprep.subr.mxu0 0.0
        %348 = vmatpush1.xpose.msra.mxu0 0.0
        %349 = vmatprep.subr.mxu0 0.0
        %350 = vmatpush1.xpose.msra.mxu0 0.0
        %351 = vmatprep.subr.mxu0 0.0
        %352 = vmatpush1.xpose.msra.mxu0 0.0
        %353 = vmatprep.subr.mxu0 0.0
        %354 = vmatpush1.xpose.msra.mxu0 %v323
        %355 = vmatprep.subr.mxu0 0.0
        %356 = vmatpush1.xpose.msra.mxu0 %v320
        %357 = vmatprep.subr.mxu0 0.0
        %358 = vmatpush2.xpose.msra.mxu0 0.0
        %359 = vmatprep.subr.mxu0 0.0
        %360 = vmatpush2.xpose.msra.mxu0 0.0
        %361 = vmatprep.subr.mxu0 0.0
        %362 = vmatpush2.xpose.msra.mxu0 0.0
        %363 = vmatprep.subr.mxu0 0.0
        %364 = vmatpush2.xpose.msra.mxu0 0.0
        %365 = vmatprep.subr.mxu0 0.0
        %366 = vmatpush2.xpose.msra.mxu0 0.0
        %367 = vmatprep.subr.mxu0 0.0
        %368 = vmatpush2.xpose.msra.mxu0 0.0
        %369 = vmatprep.subr.mxu0 0.0
        %370 = vmatpush2.xpose.msra.mxu0 0.0
        %371 = vmatprep.subr.mxu0 0.0
        %372 = vmatpush2.xpose.msra.mxu0 0.0
        %373 = vmatprep.subr.mxu0 0.0
        %374 = vmatpush2.xpose.msra.mxu0 0.0
        %375 = vmatprep.subr.mxu0 0.0
        %376 = vmatpush2.xpose.msra.mxu0 0.0
        %377 = vmatprep.subr.mxu0 0.0
        %378 = vmatpush2.xpose.msra.mxu0 0.0
        %379 = vmatprep.subr.mxu0 0.0
        %380 = vmatpush2.xpose.msra.mxu0 0.0
        %381 = vmatprep.subr.mxu0 0.0
        %382 = vmatpush2.xpose.msra.mxu0 0.0
        %383 = vmatprep.subr.mxu0 0.0
        %384 = vmatpush2.xpose.msra.mxu0 0.0
        %385 = vmatprep.subr.mxu0 0.0
        %386 = vmatpush2.xpose.msra.mxu0 0.0
        %387 = vmatprep.subr.mxu0 0.0
        %388 = vmatpush2.xpose.msra.mxu0 0.0
        %389 = vmatprep.mubr.f32.mxu0 0.0
        %390 = vmatmul.mubr.f32.gmra.mxu0 %v317
        %v391 = vpop.f32.mrf.mxu0
        %v392 = vadd.f32 0.0, %v391
        %v393 = vpop.f32.mrf.mxu0
        %394 = vdwg.mxu0
        %v395 = vmul.f32 %v392, %v314
        %vm396 = vcmp.ne.f32.partialorder %v395, 0.0
        %v397 = vsel %vm396, %v395, -1e+10
        %vm398 = vcmask 130048
        %v399 = vsel %vm398, %v397, -inf
        %v400 = vrot.slane %v399, 4
        %v401 = vmax.f32 %v399, %v400
        %v402 = vrot.slane %v401, 2
        %v403 = vmax.f32 %v401, %v402
        %v404 = vrot.slane %v403, 1
        %v405 = vmax.f32 %v403, %v404
        %v406 = vsub.f32 %v397, %v405
        %v407 = vmul.f32 %v406, 1.442695
        %v408 = vpow.pop %v407
        %v409 = vsel %vm398, %v408, 0.0
        %v410 = vrot.slane %v409, 4
        %v411 = vadd.f32 %v409, %v410
        %v412 = vrot.slane %v411, 2
        %v413 = vadd.f32 %v411, %v412
        %v414 = vrot.slane %v413, 1
        %v415 = vadd.f32 %v413, %v414
        %v416 = vrcp.pop %v415
        %v417 = vmul.f32 1.0, %v416
        %v418 = vmul.f32 %v408, %v417
        %v419 = vmul.f32 %v418, %v314
        %420 = vxpose.xlu0.b32.start [1/16] %v419, 128
        %421 = vxpose.xlu0.b32.cont [2/16] 0.0, 128
        %422 = vxpose.xlu0.b32.cont [3/16] 0.0, 128
        %423 = vxpose.xlu0.b32.cont [4/16] 0.0, 128
        %424 = vxpose.xlu0.b32.cont [5/16] 0.0, 128
        %425 = vxpose.xlu0.b32.cont [6/16] 0.0, 128
        %426 = vxpose.xlu0.b32.cont [7/16] 0.0, 128
        %427 = vxpose.xlu0.b32.cont [8/16] 0.0, 128
        %428 = vxpose.xlu0.b32.cont [9/16] 0.0, 128
        %429 = vxpose.xlu0.b32.cont [10/16] 0.0, 128
        %430 = vxpose.xlu0.b32.cont [11/16] 0.0, 128
        %431 = vxpose.xlu0.b32.cont [12/16] 0.0, 128
        %432 = vxpose.xlu0.b32.cont [13/16] 0.0, 128
        %433 = vxpose.xlu0.b32.cont [14/16] 0.0, 128
        %434 = vxpose.xlu0.b32.cont [15/16] 0.0, 128
        %435 = vxpose.xlu0.b32.end [16/16] 0.0, 128
        %v436 = vpop.trf.xlu0
        %v437 = vpop.trf.xlu0
        %v438 = vpop.trf.xlu0
        %v439 = vpop.trf.xlu0
        %v440 = vpop.trf.xlu0
        %v441 = vpop.trf.xlu0
        %v442 = vpop.trf.xlu0
        %v443 = vpop.trf.xlu0
        %v444 = vpop.trf.xlu0
        %v445 = vpop.trf.xlu0
        %v446 = vpop.trf.xlu0
        %v447 = vpop.trf.xlu0
        %v448 = vpop.trf.xlu0
        %v449 = vpop.trf.xlu0
        %v450 = vpop.trf.xlu0
        %v451 = vpop.trf.xlu0
        %vm452 = vcmask 64512
        %v454 = vsel %vm452, %v436, 0
        %v457 = vsel %vm452, %v437, 0
        %459 = vmatprep.subr.mxu0 0.0
        %460 = vmatpush1.msra.mxu0 0.0
        %461 = vmatprep.subr.mxu0 0.0
        %462 = vmatpush1.msra.mxu0 0.0
        %463 = vmatprep.subr.mxu0 0.0
        %464 = vmatpush1.msra.mxu0 0.0
        %465 = vmatprep.subr.mxu0 0.0
        %466 = vmatpush1.msra.mxu0 0.0
        %467 = vmatprep.subr.mxu0 0.0
        %468 = vmatpush1.msra.mxu0 0.0
        %469 = vmatprep.subr.mxu0 0.0
        %470 = vmatpush1.msra.mxu0 0.0
        %471 = vmatprep.subr.mxu0 0.0
        %472 = vmatpush1.msra.mxu0 0.0
        %473 = vmatprep.subr.mxu0 0.0
        %474 = vmatpush1.msra.mxu0 0.0
        %475 = vmatprep.subr.mxu0 0.0
        %476 = vmatpush1.msra.mxu0 0.0
        %477 = vmatprep.subr.mxu0 0.0
        %478 = vmatpush1.msra.mxu0 0.0
        %479 = vmatprep.subr.mxu0 0.0
        %480 = vmatpush1.msra.mxu0 0.0
        %481 = vmatprep.subr.mxu0 0.0
        %482 = vmatpush1.msra.mxu0 0.0
        %483 = vmatprep.subr.mxu0 0.0
        %484 = vmatpush1.msra.mxu0 0.0
        %485 = vmatprep.subr.mxu0 0.0
        %486 = vmatpush1.msra.mxu0 0.0
        %487 = vmatprep.subr.mxu0 0.0
        %488 = vmatpush1.msra.mxu0 0.0
        %489 = vmatprep.subr.mxu0 0.0
        %490 = vmatpush1.msra.mxu0 %v300
        %491 = vmatprep.subr.mxu0 0.0
        %492 = vmatpush2.msra.mxu0 0.0
        %493 = vmatprep.subr.mxu0 0.0
        %494 = vmatpush2.msra.mxu0 0.0
        %495 = vmatprep.subr.mxu0 0.0
        %496 = vmatpush2.msra.mxu0 0.0
        %497 = vmatprep.subr.mxu0 0.0
        %498 = vmatpush2.msra.mxu0 0.0
        %499 = vmatprep.subr.mxu0 0.0
        %500 = vmatpush2.msra.mxu0 0.0
        %501 = vmatprep.subr.mxu0 0.0
        %502 = vmatpush2.msra.mxu0 0.0
        %503 = vmatprep.subr.mxu0 0.0
        %504 = vmatpush2.msra.mxu0 0.0
        %505 = vmatprep.subr.mxu0 0.0
        %506 = vmatpush2.msra.mxu0 0.0
        %507 = vmatprep.subr.mxu0 0.0
        %508 = vmatpush2.msra.mxu0 0.0
        %509 = vmatprep.subr.mxu0 0.0
        %510 = vmatpush2.msra.mxu0 0.0
        %511 = vmatprep.subr.mxu0 0.0
        %512 = vmatpush2.msra.mxu0 0.0
        %513 = vmatprep.subr.mxu0 0.0
        %514 = vmatpush2.msra.mxu0 0.0
        %515 = vmatprep.subr.mxu0 0.0
        %516 = vmatpush2.msra.mxu0 0.0
        %517 = vmatprep.subr.mxu0 0.0
        %518 = vmatpush2.msra.mxu0 0.0
        %519 = vmatprep.subr.mxu0 0.0
        %520 = vmatpush2.msra.mxu0 0.0
        %521 = vmatprep.subr.mxu0 0.0
        %522 = vmatpush2.msra.mxu0 0.0
        %523 = vmatprep.mubr.f32.mxu0 0.0
        %524 = vmatmul.mubr.f32.gmra.mxu0 %v454
        %v525 = vpop.f32.mrf.mxu0
        %v526 = vadd.f32 0.0, %v525
        %v527 = vpop.f32.mrf.mxu0
        %528 = vmatprep.mubr.f32.mxu0 0.0
        %529 = vmatmul.mubr.f32.gmra.mxu0 %v457
        %v530 = vpop.f32.mrf.mxu0
        %v531 = vadd.f32 0.0, %v530
        %v532 = vpop.f32.mrf.mxu0
        %533 = vdwg.mxu0
        %534 = vmax.xlane.f32.xlu0 %v399
        %v535 = vpop.xlane.xlu0 %534
        %v536 = vsub.f32 %v397, %v535
        %v537 = vmul.f32 %v536, 1.442695
        %v538 = vpow.pop %v537
        %v539 = vsel %vm398, %v538, 0.0
        %540 = vadd.xlane.f32.xlu0 %v539
        %v541 = vpop.xlane.xlu0 %540
        %v542 = vrcp.pop %v541
        %v543 = vmul.f32 1.0, %v542
        %v544 = vmul.f32 %v538, %v543
        %v545 = vmul.f32 %v544, %v314
        %v547 = vsel %vm398, %v545, 0
        %549 = vmatprep.subr.mxu0 0.0
        %550 = vmatpush1.msra.mxu0 0.0
        %551 = vmatprep.subr.mxu0 0.0
        %552 = vmatpush1.msra.mxu0 0.0
        %553 = vmatprep.subr.mxu0 0.0
        %554 = vmatpush1.msra.mxu0 0.0
        %555 = vmatprep.subr.mxu0 0.0
        %556 = vmatpush1.msra.mxu0 0.0
        %557 = vmatprep.subr.mxu0 0.0
        %558 = vmatpush1.msra.mxu0 0.0
        %559 = vmatprep.subr.mxu0 0.0
        %560 = vmatpush1.msra.mxu0 0.0
        %561 = vmatprep.subr.mxu0 0.0
        %562 = vmatpush1.msra.mxu0 0.0
        %563 = vmatprep.subr.mxu0 0.0
        %564 = vmatpush1.msra.mxu0 0.0
        %565 = vmatprep.subr.mxu0 0.0
        %566 = vmatpush1.msra.mxu0 0.0
        %567 = vmatprep.subr.mxu0 0.0
        %568 = vmatpush1.msra.mxu0 0.0
        %569 = vmatprep.subr.mxu0 0.0
        %570 = vmatpush1.msra.mxu0 0.0
        %571 = vmatprep.subr.mxu0 0.0
        %572 = vmatpush1.msra.mxu0 0.0
        %573 = vmatprep.subr.mxu0 0.0
        %574 = vmatpush1.msra.mxu0 0.0
        %575 = vmatprep.subr.mxu0 0.0
        %576 = vmatpush1.msra.mxu0 0.0
        %577 = vmatprep.subr.mxu0 0.0
        %578 = vmatpush1.msra.mxu0 %v299
        %579 = vmatprep.subr.mxu0 0.0
        %580 = vmatpush1.msra.mxu0 %v298
        %581 = vmatprep.subr.mxu0 0.0
        %582 = vmatpush2.msra.mxu0 0.0
        %583 = vmatprep.subr.mxu0 0.0
        %584 = vmatpush2.msra.mxu0 0.0
        %585 = vmatprep.subr.mxu0 0.0
        %586 = vmatpush2.msra.mxu0 0.0
        %587 = vmatprep.subr.mxu0 0.0
        %588 = vmatpush2.msra.mxu0 0.0
        %589 = vmatprep.subr.mxu0 0.0
        %590 = vmatpush2.msra.mxu0 0.0
        %591 = vmatprep.subr.mxu0 0.0
        %592 = vmatpush2.msra.mxu0 0.0
        %593 = vmatprep.subr.mxu0 0.0
        %594 = vmatpush2.msra.mxu0 0.0
        %595 = vmatprep.subr.mxu0 0.0
        %596 = vmatpush2.msra.mxu0 0.0
        %597 = vmatprep.subr.mxu0 0.0
        %598 = vmatpush2.msra.mxu0 0.0
        %599 = vmatprep.subr.mxu0 0.0
        %600 = vmatpush2.msra.mxu0 0.0
        %601 = vmatprep.subr.mxu0 0.0
        %602 = vmatpush2.msra.mxu0 0.0
        %603 = vmatprep.subr.mxu0 0.0
        %604 = vmatpush2.msra.mxu0 0.0
        %605 = vmatprep.subr.mxu0 0.0
        %606 = vmatpush2.msra.mxu0 0.0
        %607 = vmatprep.subr.mxu0 0.0
        %608 = vmatpush2.msra.mxu0 0.0
        %609 = vmatprep.subr.mxu0 0.0
        %610 = vmatpush2.msra.mxu0 0.0
        %611 = vmatprep.subr.mxu0 0.0
        %612 = vmatpush2.msra.mxu0 0.0
        %613 = vmatprep.mubr.f32.mxu0 0.0
        %614 = vmatmul.mubr.f32.gmra.mxu0 %v547
        %v615 = vpop.f32.mrf.mxu0
        %v616 = vadd.f32 0.0, %v615
        %v617 = vpop.f32.mrf.mxu0
        %618 = vdwg.mxu0
        %v619 = vsub.f32 %v298, %v526
        %v620 = vsub.f32 %v299, %v531
        %v621 = vmul.f32 %v619, %v619
        %v622 = vmul.f32 %v620, %v620
        %v623 = vsel %vm315, %v621, 0.0
        %624 = vadd.xlane.f32.xlu0 %v623
        %v625 = vpop.xlane.xlu0 %624
        %v626 = vsel %vm315, %v622, 0.0
        %627 = vadd.xlane.f32.xlu0 %v626
        %v628 = vpop.xlane.xlu0 %627
        %v629 = vadd.f32 %v625, %v628
        %v630 = vrot.slane %v629, 4
        %v631 = vadd.f32 %v629, %v630
        %v632 = vrot.slane %v631, 2
        %v633 = vadd.f32 %v631, %v632
        %v634 = vrot.slane %v633, 1
        %v635 = vadd.f32 %v633, %v634
        %vm636 = vcmask 0
        %637 = vst.msk [vmem:[%s294] sm:$0x1] %vm636, %v635
        %v638 = vsub.f32 %v300, %v616
        %v639 = vmul.f32 %v638, %v638
        %v640 = vsel %vm315, %v639, 0.0
        %641 = vadd.xlane.f32.xlu0 %v640
        %v642 = vpop.xlane.xlu0 %641
        %v643 = vrot.slane %v642, 4
        %v644 = vadd.f32 %v642, %v643
        %v645 = vrot.slane %v644, 2
        %v646 = vadd.f32 %v644, %v645
        %v647 = vrot.slane %v646, 1
        %v648 = vadd.f32 %v646, %v647
        %649 = vst.msk [vmem:[%s297] sm:$0x1] %vm636, %v648
        %p650 = scmp.lt.s32.totalorder %s20, 1
        %s651 = scalar_select %p650, %s20, 1
        %s652 = scalar_lea.vmem %s4, %s651
        %p653 = scmp.lt.s32.totalorder %s20, 1
        %s654 = scalar_select %p653, %s20, 1
        %s655 = scalar_lea.vmem %s5, %s654
        // Predicated region
        $region41: #{grounded_coreferencer_forward.1} parent=35 // pred_check
          %p656 = pneg %p142
        $region42: #{grounded_coreferencer_forward.1} parent=35 // pred_check_branch
          %658 = sbr.rel (%p656) target = $region44
        $region43: #{grounded_coreferencer_forward.1} parent=35 // pred_region
          _
        $region44: #{grounded_coreferencer_forward.1} parent=35 // pred_fallthru
          _
        // Predicated region
        $region45: #{grounded_coreferencer_forward.1} parent=35 // pred_check
          %p659 = pneg %p168
        $region46: #{grounded_coreferencer_forward.1} parent=35 // pred_check_branch
          %661 = sbr.rel (%p659) target = $region48
        $region47: #{grounded_coreferencer_forward.1} parent=35 // pred_region
          _
        $region48: #{grounded_coreferencer_forward.1} parent=35 // pred_fallthru
          _
      $region36: #{grounded_coreferencer_forward.1} parent=5 // pred_fallthru
        _
      %p662 = scmp.le.s32.totalorder 2, %s15
      // Predicated region
      $region49: #{grounded_coreferencer_forward.1} parent=5 // pred_check
        %p663 = pneg %p662
      $region50: #{grounded_coreferencer_forward.1} parent=5 // pred_check_branch
        %665 = sbr.rel (%p663) target = $region52
      $region51: #{grounded_coreferencer_forward.1} parent=5 // pred_region
        %s666 = ssub.s32 %s15, 2
        // Predicated region
        $region53: #{grounded_coreferencer_forward.1} parent=51 // pred_check
          %p667 = pneg %p148
        $region54: #{grounded_coreferencer_forward.1} parent=51 // pred_check_branch
          %669 = sbr.rel (%p667) target = $region56
        $region55: #{grounded_coreferencer_forward.1} parent=51 // pred_region
          %p670 = scmp.lt.s32.totalorder %s21, 1
          %s671 = scalar_select %p670, %s21, 1
          %s672 = scalar_lea.vmem %s4, %s671
        $region56: #{grounded_coreferencer_forward.1} parent=51 // pred_fallthru
          _
        // Predicated region
        $region57: #{grounded_coreferencer_forward.1} parent=51 // pred_check
          %p673 = pneg %p174
        $region58: #{grounded_coreferencer_forward.1} parent=51 // pred_check_branch
          %675 = sbr.rel (%p673) target = $region60
        $region59: #{grounded_coreferencer_forward.1} parent=51 // pred_region
          %p676 = scmp.lt.s32.totalorder %s21, 1
          %s677 = scalar_select %p676, %s21, 1
          %s678 = scalar_lea.vmem %s5, %s677
        $region60: #{grounded_coreferencer_forward.1} parent=51 // pred_fallthru
          _
      $region52: #{grounded_coreferencer_forward.1} parent=5 // pred_fallthru
        _
    $region6: #{grounded_coreferencer_forward.1} parent=1 // loop_footer
      %s19 = sadd.s32 1, %s15
    $region7: #{grounded_coreferencer_forward.1} parent=1 // loop_footer_branch
      %14 = sbr.rel target = $region3
    $region8: #{grounded_coreferencer_forward.1} parent=1 // loop_exit
      _
    %679 = vsyncpa [#allocation3], 1
    %s680 = scalar_lea.sflag [#allocation3], 1
    %681 = vsyncpa %s680, 1

</llo_original>
